<compile_context>
chip_gen: v6e
topology: v6e:2x2x1
jax: 0.10.0
libtpu: 0.0.40
codegen_flags: <defaults>
</compile_context>

<pallas_src>
import jax
import jax.numpy as jnp
from jax.experimental import pallas as pl
from jax.experimental.pallas import tpu as pltpu


def _round_up(x: int, m: int) -> int:
    return ((x + m - 1) // m) * m


def mlp_kernel(x_ref, w1_ref, b1_ref, w2_ref, b2_ref, o_ref):
    # x_ref:  (TB, Din_p) bf16     w1_ref: (Din_p, H_p) bf16   b1_ref: (1, H_p) f32
    # w2_ref: (H_p, Dout_p) bf16   b2_ref: (1, Dout_p) f32     o_ref:  (TB, Dout_p) f32
    # Layer 1: Linear (bf16 MXU, f32 accumulate) -> Dropout(eval == identity) -> ReLU
    h = jnp.dot(x_ref[...], w1_ref[...], preferred_element_type=jnp.float32)
    h = h + b1_ref[...]
    h = jnp.maximum(h, 0.0)
    # Layer 2: Linear.  Cast the f32 accumulator to bf16 for the MXU fast path.
    h = h.astype(w2_ref.dtype)
    out = jnp.dot(h, w2_ref[...], preferred_element_type=jnp.float32) + b2_ref[...]
    o_ref[...] = out.astype(o_ref.dtype)


def mlp_forward(x_nchw, w1, b1, w2, b2, *, block_batch=512):
    """x_nchw: (N, C, H, W). w1: (dim_in, dim_hidden), b1: (1, dim_hidden),
    w2: (dim_hidden, dim_out), b2: (1, dim_out). Returns (N, dim_out) float32."""
    n = x_nchw.shape[0]
    dim_in = x_nchw.shape[1] * x_nchw.shape[-2] * x_nchw.shape[-1]
    dim_hidden = w1.shape[1]
    dim_out = w2.shape[1]

    x2d = x_nchw.reshape(n, dim_in)            # matches x.view(-1, C*H*W)

    # --- lane/sublane padding (pure layout plumbing, zeros are exact) ---
    din_p = _round_up(dim_in, 128)
    dh_p = _round_up(dim_hidden, 128)
    do_p = _round_up(dim_out, 128)

    # Batch tile: multiple of 8 sublanes; pad N up to a multiple of the tile.
    tb = min(block_batch, _round_up(n, 8))
    n_p = _round_up(n, tb)

    x_p = jnp.zeros((n_p, din_p), jnp.bfloat16)
    x_p = x_p.at[:n, :dim_in].set(x2d.astype(jnp.bfloat16))
    w1_p = jnp.zeros((din_p, dh_p), jnp.bfloat16)
    w1_p = w1_p.at[:dim_in, :dim_hidden].set(w1.astype(jnp.bfloat16))
    b1_p = jnp.zeros((1, dh_p), jnp.float32)
    b1_p = b1_p.at[:, :dim_hidden].set(b1.astype(jnp.float32))
    w2_p = jnp.zeros((dh_p, do_p), jnp.bfloat16)
    w2_p = w2_p.at[:dim_hidden, :dim_out].set(w2.astype(jnp.bfloat16))
    b2_p = jnp.zeros((1, do_p), jnp.float32)
    b2_p = b2_p.at[:, :dim_out].set(b2.astype(jnp.float32))

    grid = (n_p // tb,)

    flops = 2 * n_p * (din_p * dh_p + dh_p * do_p)
    bytes_accessed = (x_p.size * 2 + w1_p.size * 2 + w2_p.size * 2
                      + b1_p.size * 4 + b2_p.size * 4 + n_p * do_p * 4)

    out_p = pl.pallas_call(
        mlp_kernel,
        out_shape=jax.ShapeDtypeStruct((n_p, do_p), jnp.float32),
        grid=grid,
        in_specs=[
            # Batch-tiled, pipelined x.
            pl.BlockSpec((tb, din_p), lambda i: (i, 0)),
            # Weights/biases: constant index_map -> VMEM-resident across grid.
            pl.BlockSpec((din_p, dh_p), lambda i: (0, 0)),
            pl.BlockSpec((1, dh_p), lambda i: (0, 0)),
            pl.BlockSpec((dh_p, do_p), lambda i: (0, 0)),
            pl.BlockSpec((1, do_p), lambda i: (0, 0)),
        ],
        # Lane-dense (multiple-of-128) output block -> unmasked stores.
        out_specs=pl.BlockSpec((tb, do_p), lambda i: (i, 0)),
        compiler_params=pltpu.CompilerParams(
            # Independent batch tiles: shard across both TCs on v7x.
            dimension_semantics=("parallel",),
            # Allow big batch tiles; stays within physical VMEM on all gens.
            vmem_limit_bytes=64 * 1024 * 1024,
        ),
        cost_estimate=pl.CostEstimate(
            flops=flops, transcendentals=0, bytes_accessed=bytes_accessed),
    )(x_p, w1_p, b1_p, w2_p, b2_p)

    # Strip batch / output-lane padding.
    return out_p[:n, :dim_out]


if __name__ == "__main__":
    # Small shapes consistent with the module: MNIST-like flattened input.
    batch, chans, spatial = 2, 1, 16            # dim_in = 1*16*16 = 256
    dim_in = chans * spatial * spatial
    dim_hidden = 32
    dim_out = 10

    key = jax.random.PRNGKey(0)
    kx, k1, k2, k3, k4 = jax.random.split(key, 5)

    x = jax.random.normal(kx, (batch, chans, spatial, spatial), dtype=jnp.float32)

    # Deterministic parameter init mimicking nn.Linear's U(-1/sqrt(fan_in), +1/sqrt(fan_in)).
    bound1 = 1.0 / jnp.sqrt(dim_in)
    w1 = jax.random.uniform(k1, (dim_in, dim_hidden), jnp.float32, -bound1, bound1)
    b1 = jax.random.uniform(k2, (1, dim_hidden), jnp.float32, -bound1, bound1)
    bound2 = 1.0 / jnp.sqrt(dim_hidden)
    w2 = jax.random.uniform(k3, (dim_hidden, dim_out), jnp.float32, -bound2, bound2)
    b2 = jax.random.uniform(k4, (1, dim_out), jnp.float32, -bound2, bound2)

    out = mlp_forward(x, w1, b1, w2, b2)
    jax.block_until_ready(out)

    # Pure-JAX reference with the same bf16-input / f32-accumulate quantization
    # that the kernel uses (MXU fast path).
    x2d = x.reshape(batch, dim_in)
    xq = x2d.astype(jnp.bfloat16).astype(jnp.float32)
    w1q = w1.astype(jnp.bfloat16).astype(jnp.float32)
    w2q = w2.astype(jnp.bfloat16).astype(jnp.float32)
    h = jnp.maximum(xq @ w1q + b1, 0.0)
    hq = h.astype(jnp.bfloat16).astype(jnp.float32)
    ref = hq @ w2q + b2

    assert out.shape == (batch, dim_out)
    assert jnp.allclose(out, ref, atol=2e-2, rtol=2e-2)

    print("KERNEL_OK")
</pallas_src>

<mosaic_0001>
module attributes {stable_mosaic.version = 11 : i64} {
  func.func @mlp_kernel(%arg0: i32, %arg1: memref<8x256xbf16, #tpu.memory_space<vmem>>, %arg2: memref<256x128xbf16, #tpu.memory_space<vmem>>, %arg3: memref<1x128xf32, #tpu.memory_space<vmem>>, %arg4: memref<128x128xbf16, #tpu.memory_space<vmem>>, %arg5: memref<1x128xf32, #tpu.memory_space<vmem>>, %arg6: memref<8x128xf32, #tpu.memory_space<vmem>>) attributes {dimension_semantics = [#tpu.dimension_semantics<parallel>], iteration_bounds = array<i64: 1>, scalar_prefetch = 0 : i64, scratch_operands = 0 : i64, tpu.core_type = #tpu.core_type<tc>, window_params = [{transform_indices = @transform_0, window_bounds = array<i64: 8, 256>}, {pipeline_mode = #tpu.pipeline_mode<synchronous>, transform_indices = @transform_1, window_bounds = array<i64: 256, 128>}, {pipeline_mode = #tpu.pipeline_mode<synchronous>, transform_indices = @transform_2, window_bounds = array<i64: 1, 128>}, {pipeline_mode = #tpu.pipeline_mode<synchronous>, transform_indices = @transform_3, window_bounds = array<i64: 128, 128>}, {pipeline_mode = #tpu.pipeline_mode<synchronous>, transform_indices = @transform_4, window_bounds = array<i64: 1, 128>}, {transform_indices = @transform_5, window_bounds = array<i64: 8, 128>}]} {
    %c0 = arith.constant 0 : index
    %c0_0 = arith.constant 0 : index
    %0 = vector.load %arg1[%c0, %c0_0] : memref<8x256xbf16, #tpu.memory_space<vmem>>, vector<8x256xbf16>
    %c0_1 = arith.constant 0 : index
    %c0_2 = arith.constant 0 : index
    %1 = vector.load %arg2[%c0_1, %c0_2] : memref<256x128xbf16, #tpu.memory_space<vmem>>, vector<256x128xbf16>
    %cst = arith.constant dense<0.000000e+00> : vector<8x128xf32>
    %2 = tpu.matmul %0, %1, %cst {dimension_numbers = #tpu.dot_dimension_numbers<[1], [0], [0], [1], [0, 0, 1, 1], [], []>} : vector<8x256xbf16>, vector<256x128xbf16>, vector<8x128xf32> -> vector<8x128xf32>
    %c0_3 = arith.constant 0 : index
    %c0_4 = arith.constant 0 : index
    %3 = vector.load %arg3[%c0_3, %c0_4] : memref<1x128xf32, #tpu.memory_space<vmem>>, vector<1x128xf32>
    %4 = vector.broadcast %3 : vector<1x128xf32> to vector<8x128xf32>
    %5 = arith.addf %2, %4 : vector<8x128xf32>
    %cst_5 = arith.constant 0.000000e+00 : f32
    %6 = vector.broadcast %cst_5 : f32 to vector<8x128xf32>
    %7 = arith.maximumf %5, %6 : vector<8x128xf32>
    %8 = arith.truncf %7 : vector<8x128xf32> to vector<8x128xbf16>
    %c0_6 = arith.constant 0 : index
    %c0_7 = arith.constant 0 : index
    %9 = vector.load %arg4[%c0_6, %c0_7] : memref<128x128xbf16, #tpu.memory_space<vmem>>, vector<128x128xbf16>
    %cst_8 = arith.constant dense<0.000000e+00> : vector<8x128xf32>
    %10 = tpu.matmul %8, %9, %cst_8 {dimension_numbers = #tpu.dot_dimension_numbers<[1], [0], [0], [1], [0, 0, 1, 1], [], []>} : vector<8x128xbf16>, vector<128x128xbf16>, vector<8x128xf32> -> vector<8x128xf32>
    %c0_9 = arith.constant 0 : index
    %c0_10 = arith.constant 0 : index
    %11 = vector.load %arg5[%c0_9, %c0_10] : memref<1x128xf32, #tpu.memory_space<vmem>>, vector<1x128xf32>
    %12 = vector.broadcast %11 : vector<1x128xf32> to vector<8x128xf32>
    %13 = arith.addf %10, %12 : vector<8x128xf32>
    %c0_11 = arith.constant 0 : index
    %c0_12 = arith.constant 0 : index
    %14 = vector.load %arg6[%c0_11, %c0_12] : memref<8x128xf32, #tpu.memory_space<vmem>>, vector<8x128xf32>
    tpu.vector_store %arg6[%c0_11, %c0_12], %13 {strides = array<i32>} : memref<8x128xf32, #tpu.memory_space<vmem>>, vector<8x128xf32>,
    return
  }
  func.func @transform_0(%arg0: i32) -> (i32, i32) {
    %c0_i32 = arith.constant 0 : i32
    %c0_i32_0 = arith.constant 0 : i32
    return %arg0, %c0_i32 : i32, i32
  }
  func.func @transform_1(%arg0: i32) -> (i32, i32) {
    %c0_i32 = arith.constant 0 : i32
    %c0_i32_0 = arith.constant 0 : i32
    %c0_i32_1 = arith.constant 0 : i32
    return %c0_i32, %c0_i32_0 : i32, i32
  }
  func.func @transform_2(%arg0: i32) -> (i32, i32) {
    %c0_i32 = arith.constant 0 : i32
    %c0_i32_0 = arith.constant 0 : i32
    %c0_i32_1 = arith.constant 0 : i32
    return %c0_i32, %c0_i32_0 : i32, i32
  }
  func.func @transform_3(%arg0: i32) -> (i32, i32) {
    %c0_i32 = arith.constant 0 : i32
    %c0_i32_0 = arith.constant 0 : i32
    %c0_i32_1 = arith.constant 0 : i32
    return %c0_i32, %c0_i32_0 : i32, i32
  }
  func.func @transform_4(%arg0: i32) -> (i32, i32) {
    %c0_i32 = arith.constant 0 : i32
    %c0_i32_0 = arith.constant 0 : i32
    %c0_i32_1 = arith.constant 0 : i32
    return %c0_i32, %c0_i32_0 : i32, i32
  }
  func.func @transform_5(%arg0: i32) -> (i32, i32) {
    %c0_i32 = arith.constant 0 : i32
    %c0_i32_0 = arith.constant 0 : i32
    return %arg0, %c0_i32 : i32, i32
  }
}

</mosaic_0001>

<llo_original>
// kernel: tpu_custom_call.1
$region0: #{tpu_custom_call.1}
  #allocation0 [shape = 'u32[]', space=smem, size = 0x4, offset = 0x4, fixed_abs, tag = 'smem constant byte address 0x4 - core index']
  #allocation1 [shape = 'u32[144,128]{1,0:T(1,128)}', space=vmem, size = 0x12000, scoped, tag = 'internal scratch']
  %s0 = inlined_call_operand.hbm [shape: bf16[8,256], index: 0, kind: input, shape index: {}]
  %s1 = inlined_call_operand.hbm [shape: bf16[256,128], index: 1, kind: input, shape index: {}]
  %s2 = inlined_call_operand.vmem [shape: f32[1,128], index: 2, kind: input, shape index: {}]
  %s3 = inlined_call_operand.hbm [shape: bf16[128,128], index: 3, kind: input, shape index: {}]
  %s4 = inlined_call_operand.vmem [shape: f32[1,128], index: 4, kind: input, shape index: {}]
  %s5 = inlined_call_operand.hbm [shape: f32[8,128], index: 5, kind: output, shape index: {}]
  %s6 = sld [smem:[#allocation0]]
  $region42: #{tpu_custom_call.1} parent=0
    _
  %s8 = ssub.s32 1, %s6
  %s9 = scalar_select 0, %s8, %s6
  $region1: #{tpu_custom_call.1} parent=0
    #allocation2 [shape = 'u8[4096]{0}', space=vmem, size = 0x1000, scoped, tag = 'input window, operand 0, single buffered']
    #allocation3 [shape = 's32[1]{0}', space=sflag, size = 0x4, scoped, tag = 'scoped memory for tpu_custom_call.1']
    #allocation4 [shape = 's32[1]{0}', space=sflag, size = 0x4, scoped, tag = 'scoped memory for tpu_custom_call.1']
    #allocation5 [shape = 'u8[65536]{0}', space=vmem, size = 0x10000, scoped, tag = 'input window, operand 1, single buffered']
    #allocation6 [shape = 's32[1]{0}', space=sflag, size = 0x4, scoped, tag = 'scoped memory for tpu_custom_call.1']
    #allocation7 [shape = 'u8[32768]{0}', space=vmem, size = 0x8000, scoped, tag = 'input window, operand 3, single buffered']
    #allocation8 [shape = 'u8[4096]{0}', space=vmem, size = 0x1000, scoped, tag = 'output window, operand 0, single buffered']
    %10 = vsyncpa [#allocation3], 0
    %11 = vsyncpa [#allocation6], 0
    %12 = vsyncpa [#allocation4], 0
    // Predicated region
    $region2: #{tpu_custom_call.1} parent=1 // pred_check
      _
    $region3: #{tpu_custom_call.1} parent=1 // pred_check_branch
      %14 = sbr.rel (0) target = $region5
    $region4: #{tpu_custom_call.1} parent=1 // pred_region
      %s16 = ssub.s32 128, 128
      %17 = vsyncadd [#allocation3], %s16
      %s19 = sshll.u32 [#allocation2], 4
      %s20 = int_to_ptr.vmem [resolvable:$true] %s19
      %22 = dma.hbm_to_vmem [thread:$0]  %s0, 128, %s20, [#allocation3]
    $region5: #{tpu_custom_call.1} parent=1 // pred_fallthru
      _
    // Predicated region
    $region6: #{tpu_custom_call.1} parent=1 // pred_check
      _
    $region7: #{tpu_custom_call.1} parent=1 // pred_check_branch
      %24 = sbr.rel (0) target = $region9
    $region8: #{tpu_custom_call.1} parent=1 // pred_region
      %s26 = ssub.s32 2048, 2048
      %27 = vsyncadd [#allocation6], %s26
      %s28 = sshll.u32 [#allocation5], 4
      %s29 = int_to_ptr.vmem [resolvable:$true] %s28
      %34 = dma.hbm_to_vmem [thread:$0]  %s1, 2048, %s29, [#allocation6], 64, 64, 4
    $region9: #{tpu_custom_call.1} parent=1 // pred_fallthru
      _
    // Predicated region
    $region10: #{tpu_custom_call.1} parent=1 // pred_check
      _
    $region11: #{tpu_custom_call.1} parent=1 // pred_check_branch
      %36 = sbr.rel (0) target = $region13
    $region12: #{tpu_custom_call.1} parent=1 // pred_region
      _
    $region13: #{tpu_custom_call.1} parent=1 // pred_fallthru
      _
    // Predicated region
    $region14: #{tpu_custom_call.1} parent=1 // pred_check
      _
    $region15: #{tpu_custom_call.1} parent=1 // pred_check_branch
      %38 = sbr.rel (0) target = $region17
    $region16: #{tpu_custom_call.1} parent=1 // pred_region
      %s40 = ssub.s32 1024, 1024
      %41 = vsyncadd [#allocation6], %s40
      %s42 = sshll.u32 [#allocation7], 4
      %s43 = int_to_ptr.vmem [resolvable:$true] %s42
      %48 = dma.hbm_to_vmem [thread:$0]  %s3, 1024, %s43, [#allocation6], 64, 64, 4
    $region17: #{tpu_custom_call.1} parent=1 // pred_fallthru
      _
    // Predicated region
    $region18: #{tpu_custom_call.1} parent=1 // pred_check
      _
    $region19: #{tpu_custom_call.1} parent=1 // pred_check_branch
      %50 = sbr.rel (0) target = $region21
    $region20: #{tpu_custom_call.1} parent=1 // pred_region
      _
    $region21: #{tpu_custom_call.1} parent=1 // pred_fallthru
      _
    // Predicated region
    $region22: #{tpu_custom_call.1} parent=1 // pred_check
      _
    $region23: #{tpu_custom_call.1} parent=1 // pred_check_branch
      %52 = sbr.rel (0) target = $region25
    $region24: #{tpu_custom_call.1} parent=1 // pred_region
      %53 = dma.done [#allocation3], 128
    $region25: #{tpu_custom_call.1} parent=1 // pred_fallthru
      _
    // Predicated region
    $region26: #{tpu_custom_call.1} parent=1 // pred_check
      _
    $region27: #{tpu_custom_call.1} parent=1 // pred_check_branch
      %55 = sbr.rel (0) target = $region29
    $region28: #{tpu_custom_call.1} parent=1 // pred_region
      %56 = dma.done [#allocation6], 2048
    $region29: #{tpu_custom_call.1} parent=1 // pred_fallthru
      _
    // Predicated region
    $region30: #{tpu_custom_call.1} parent=1 // pred_check
      _
    $region31: #{tpu_custom_call.1} parent=1 // pred_check_branch
      %58 = sbr.rel (0) target = $region33
    $region32: #{tpu_custom_call.1} parent=1 // pred_region
      %59 = dma.done [#allocation6], 1024
    $region33: #{tpu_custom_call.1} parent=1 // pred_fallthru
      _
    %v61 = vld [vmem:[#allocation2] sm:$0xff]
    %v62 = vld [vmem:[#allocation5] sm:$0xf]
    %v63 = vld [vmem:[#allocation5 + $0x4] sm:$0xf]
    %v64 = vld [vmem:[#allocation5 + $0x8] sm:$0xf]
    %v65 = vld [vmem:[#allocation5 + $0xc] sm:$0xf]
    %v66 = vld [vmem:[#allocation5 + $0x10] sm:$0xf]
    %v67 = vld [vmem:[#allocation5 + $0x14] sm:$0xf]
    %v68 = vld [vmem:[#allocation5 + $0x18] sm:$0xf]
    %v69 = vld [vmem:[#allocation5 + $0x1c] sm:$0xf]
    %v70 = vld [vmem:[#allocation5 + $0x20] sm:$0xf]
    %v71 = vld [vmem:[#allocation5 + $0x24] sm:$0xf]
    %v72 = vld [vmem:[#allocation5 + $0x28] sm:$0xf]
    %v73 = vld [vmem:[#allocation5 + $0x2c] sm:$0xf]
    %v74 = vld [vmem:[#allocation5 + $0x30] sm:$0xf]
    %v75 = vld [vmem:[#allocation5 + $0x34] sm:$0xf]
    %v76 = vld [vmem:[#allocation5 + $0x38] sm:$0xf]
    %v77 = vld [vmem:[#allocation5 + $0x3c] sm:$0xf]
    %v78 = vld [vmem:[#allocation5 + $0x40] sm:$0xf]
    %v79 = vld [vmem:[#allocation5 + $0x44] sm:$0xf]
    %v80 = vld [vmem:[#allocation5 + $0x48] sm:$0xf]
    %v81 = vld [vmem:[#allocation5 + $0x4c] sm:$0xf]
    %v82 = vld [vmem:[#allocation5 + $0x50] sm:$0xf]
    %v83 = vld [vmem:[#allocation5 + $0x54] sm:$0xf]
    %v84 = vld [vmem:[#allocation5 + $0x58] sm:$0xf]
    %v85 = vld [vmem:[#allocation5 + $0x5c] sm:$0xf]
    %v86 = vld [vmem:[#allocation5 + $0x60] sm:$0xf]
    %v87 = vld [vmem:[#allocation5 + $0x64] sm:$0xf]
    %v88 = vld [vmem:[#allocation5 + $0x68] sm:$0xf]
    %v89 = vld [vmem:[#allocation5 + $0x6c] sm:$0xf]
    %v90 = vld [vmem:[#allocation5 + $0x70] sm:$0xf]
    %v91 = vld [vmem:[#allocation5 + $0x74] sm:$0xf]
    %v92 = vld [vmem:[#allocation5 + $0x78] sm:$0xf]
    %v93 = vld [vmem:[#allocation5 + $0x7c] sm:$0xf]
    %v94 = vld [vmem:[%s2] sm:$0x1]
    %v96 = vlaneseq
    %v97 = vshrl.u32 %v96, 7
    %v98 = vsub.s32 0, %v97
    %v99 = vrot.slane %v94, %v98
    %v102 = vunpack.c.l.b16 %v61
    %v103 = vunpack.c.h.b16 %v61
    %v104 = vpack.c.b16 %v102, %v102
    %v105 = vpack.c.b16 %v103, %v103
    %v140 = vunpack.c.l.b16 %v62
    %v141 = vunpack.c.l.b16 %v63
    %v142 = vunpack.c.l.b16 %v64
    %v143 = vunpack.c.l.b16 %v65
    %v144 = vunpack.c.l.b16 %v66
    %v145 = vunpack.c.l.b16 %v67
    %v146 = vunpack.c.l.b16 %v68
    %v147 = vunpack.c.l.b16 %v69
    %v148 = vunpack.c.l.b16 %v70
    %v149 = vunpack.c.l.b16 %v71
    %v150 = vunpack.c.l.b16 %v72
    %v151 = vunpack.c.l.b16 %v73
    %v152 = vunpack.c.l.b16 %v74
    %v153 = vunpack.c.l.b16 %v75
    %v154 = vunpack.c.l.b16 %v76
    %v155 = vunpack.c.l.b16 %v77
    %v156 = vunpack.c.l.b16 %v78
    %v157 = vunpack.c.l.b16 %v79
    %v158 = vunpack.c.l.b16 %v80
    %v159 = vunpack.c.l.b16 %v81
    %v160 = vunpack.c.l.b16 %v82
    %v161 = vunpack.c.l.b16 %v83
    %v162 = vunpack.c.l.b16 %v84
    %v163 = vunpack.c.l.b16 %v85
    %v164 = vunpack.c.l.b16 %v86
    %v165 = vunpack.c.l.b16 %v87
    %v166 = vunpack.c.l.b16 %v88
    %v167 = vunpack.c.l.b16 %v89
    %v168 = vunpack.c.l.b16 %v90
    %v169 = vunpack.c.l.b16 %v91
    %v170 = vunpack.c.l.b16 %v92
    %v171 = vunpack.c.l.b16 %v93
    %v172 = vpack.c.b16 %v141, %v140
    %v173 = vpack.c.b16 %v143, %v142
    %v174 = vpack.c.b16 %v145, %v144
    %v175 = vpack.c.b16 %v147, %v146
    %v176 = vpack.c.b16 %v149, %v148
    %v177 = vpack.c.b16 %v151, %v150
    %v178 = vpack.c.b16 %v153, %v152
    %v179 = vpack.c.b16 %v155, %v154
    %v180 = vpack.c.b16 %v157, %v156
    %v181 = vpack.c.b16 %v159, %v158
    %v182 = vpack.c.b16 %v161, %v160
    %v183 = vpack.c.b16 %v163, %v162
    %v184 = vpack.c.b16 %v165, %v164
    %v185 = vpack.c.b16 %v167, %v166
    %v186 = vpack.c.b16 %v169, %v168
    %v187 = vpack.c.b16 %v171, %v170
    %204 = vmatprep.subr.bf16.mxu0 0
    %205 = vmatpush1.bf16.msra.mxu0 %v179
    %206 = vmatprep.subr.bf16.mxu0 0
    %207 = vmatpush1.bf16.msra.mxu0 %v178
    %208 = vmatprep.subr.bf16.mxu0 0
    %209 = vmatpush1.bf16.msra.mxu0 %v177
    %210 = vmatprep.subr.bf16.mxu0 0
    %211 = vmatpush1.bf16.msra.mxu0 %v176
    %212 = vmatprep.subr.bf16.mxu0 0
    %213 = vmatpush1.bf16.msra.mxu0 %v175
    %214 = vmatprep.subr.bf16.mxu0 0
    %215 = vmatpush1.bf16.msra.mxu0 %v174
    %216 = vmatprep.subr.bf16.mxu0 0
    %217 = vmatpush1.bf16.msra.mxu0 %v173
    %218 = vmatprep.subr.bf16.mxu0 0
    %219 = vmatpush1.bf16.msra.mxu0 %v172
    %220 = vmatprep.subr.bf16.mxu0 0
    %221 = vmatpush2.bf16.msra.mxu0 %v187
    %222 = vmatprep.subr.bf16.mxu0 0
    %223 = vmatpush2.bf16.msra.mxu0 %v186
    %224 = vmatprep.subr.bf16.mxu0 0
    %225 = vmatpush2.bf16.msra.mxu0 %v185
    %226 = vmatprep.subr.bf16.mxu0 0
    %227 = vmatpush2.bf16.msra.mxu0 %v184
    %228 = vmatprep.subr.bf16.mxu0 0
    %229 = vmatpush2.bf16.msra.mxu0 %v183
    %230 = vmatprep.subr.bf16.mxu0 0
    %231 = vmatpush2.bf16.msra.mxu0 %v182
    %232 = vmatprep.subr.bf16.mxu0 0
    %233 = vmatpush2.bf16.msra.mxu0 %v181
    %234 = vmatprep.subr.bf16.mxu0 0
    %235 = vmatpush2.bf16.msra.mxu0 %v180
    %236 = vmatprep.mubr.bf16.mxu0 %v105
    %237 = vmatmul.mubr.bf16.gmra.mxu0 %v104
    %v238 = vpop.f32.mrf.mxu0
    %v239 = vadd.f32 %v99, %v238
    %v240 = vpop.f32.mrf.mxu0
    %v241 = vpop.f32.mrf.mxu0
    %v242 = vpop.f32.mrf.mxu0
    %243 = vdwg.mxu0
    %v244 = vmax.f32 %v239, 0.0
    %v245 = vpack.c.bf16 %v244, %v244
    %v246 = vld [vmem:[#allocation7] sm:$0xf]
    %v247 = vld [vmem:[#allocation7 + $0x4] sm:$0xf]
    %v248 = vld [vmem:[#allocation7 + $0x8] sm:$0xf]
    %v249 = vld [vmem:[#allocation7 + $0xc] sm:$0xf]
    %v250 = vld [vmem:[#allocation7 + $0x10] sm:$0xf]
    %v251 = vld [vmem:[#allocation7 + $0x14] sm:$0xf]
    %v252 = vld [vmem:[#allocation7 + $0x18] sm:$0xf]
    %v253 = vld [vmem:[#allocation7 + $0x1c] sm:$0xf]
    %v254 = vld [vmem:[#allocation7 + $0x20] sm:$0xf]
    %v255 = vld [vmem:[#allocation7 + $0x24] sm:$0xf]
    %v256 = vld [vmem:[#allocation7 + $0x28] sm:$0xf]
    %v257 = vld [vmem:[#allocation7 + $0x2c] sm:$0xf]
    %v258 = vld [vmem:[#allocation7 + $0x30] sm:$0xf]
    %v259 = vld [vmem:[#allocation7 + $0x34] sm:$0xf]
    %v260 = vld [vmem:[#allocation7 + $0x38] sm:$0xf]
    %v261 = vld [vmem:[#allocation7 + $0x3c] sm:$0xf]
    %v262 = vld [vmem:[%s4] sm:$0x1]
    %v264 = vlaneseq
    %v265 = vshrl.u32 %v264, 7
    %v266 = vsub.s32 0, %v265
    %v267 = vrot.slane %v262, %v266
    %v285 = vunpack.c.l.b16 %v246
    %v286 = vunpack.c.l.b16 %v247
    %v287 = vunpack.c.l.b16 %v248
    %v288 = vunpack.c.l.b16 %v249
    %v289 = vunpack.c.l.b16 %v250
    %v290 = vunpack.c.l.b16 %v251
    %v291 = vunpack.c.l.b16 %v252
    %v292 = vunpack.c.l.b16 %v253
    %v293 = vunpack.c.l.b16 %v254
    %v294 = vunpack.c.l.b16 %v255
    %v295 = vunpack.c.l.b16 %v256
    %v296 = vunpack.c.l.b16 %v257
    %v297 = vunpack.c.l.b16 %v258
    %v298 = vunpack.c.l.b16 %v259
    %v299 = vunpack.c.l.b16 %v260
    %v300 = vunpack.c.l.b16 %v261
    %v301 = vpack.c.b16 %v286, %v285
    %v302 = vpack.c.b16 %v288, %v287
    %v303 = vpack.c.b16 %v290, %v289
    %v304 = vpack.c.b16 %v292, %v291
    %v305 = vpack.c.b16 %v294, %v293
    %v306 = vpack.c.b16 %v296, %v295
    %v307 = vpack.c.b16 %v298, %v297
    %v308 = vpack.c.b16 %v300, %v299
    %317 = vmatprep.subr.bf16.mxu0 0
    %318 = vmatpush1.bf16.msra.mxu0 %v308
    %319 = vmatprep.subr.bf16.mxu0 0
    %320 = vmatpush1.bf16.msra.mxu0 %v307
    %321 = vmatprep.subr.bf16.mxu0 0
    %322 = vmatpush1.bf16.msra.mxu0 %v306
    %323 = vmatprep.subr.bf16.mxu0 0
    %324 = vmatpush1.bf16.msra.mxu0 %v305
    %325 = vmatprep.subr.bf16.mxu0 0
    %326 = vmatpush1.bf16.msra.mxu0 %v304
    %327 = vmatprep.subr.bf16.mxu0 0
    %328 = vmatpush1.bf16.msra.mxu0 %v303
    %329 = vmatprep.subr.bf16.mxu0 0
    %330 = vmatpush1.bf16.msra.mxu0 %v302
    %331 = vmatprep.subr.bf16.mxu0 0
    %332 = vmatpush1.bf16.msra.mxu0 %v301
    %333 = vmatprep.subr.bf16.mxu0 0
    %334 = vmatpush2.bf16.msra.mxu0 0
    %335 = vmatprep.subr.bf16.mxu0 0
    %336 = vmatpush2.bf16.msra.mxu0 0
    %337 = vmatprep.subr.bf16.mxu0 0
    %338 = vmatpush2.bf16.msra.mxu0 0
    %339 = vmatprep.subr.bf16.mxu0 0
    %340 = vmatpush2.bf16.msra.mxu0 0
    %341 = vmatprep.subr.bf16.mxu0 0
    %342 = vmatpush2.bf16.msra.mxu0 0
    %343 = vmatprep.subr.bf16.mxu0 0
    %344 = vmatpush2.bf16.msra.mxu0 0
    %345 = vmatprep.subr.bf16.mxu0 0
    %346 = vmatpush2.bf16.msra.mxu0 0
    %347 = vmatprep.subr.bf16.mxu0 0
    %348 = vmatpush2.bf16.msra.mxu0 0
    %349 = vmatprep.mubr.bf16.mxu0 0
    %350 = vmatmul.mubr.bf16.gmra.mxu0 %v245
    %v351 = vpop.f32.mrf.mxu0
    %v352 = vadd.f32 %v267, %v351
    %v353 = vpop.f32.mrf.mxu0
    %v354 = vpop.f32.mrf.mxu0
    %v355 = vpop.f32.mrf.mxu0
    %356 = vdwg.mxu0
    %357 = vst [vmem:[#allocation8] sm:$0xff] %v352
    // Predicated region
    $region34: #{tpu_custom_call.1} parent=1 // pred_check
      _
    $region35: #{tpu_custom_call.1} parent=1 // pred_check_branch
      %359 = sbr.rel (0) target = $region37
    $region36: #{tpu_custom_call.1} parent=1 // pred_region
      %s361 = ssub.s32 128, 128
      %362 = vsyncadd [#allocation4], %s361
      %s364 = sshll.u32 [#allocation8], 4
      %s365 = int_to_ptr.vmem [resolvable:$true] %s364
      %367 = dma.vmem_to_hbm [thread:$0]  %s365, 128, %s5, [#allocation4]
    $region37: #{tpu_custom_call.1} parent=1 // pred_fallthru
      _
    // Predicated region
    $region38: #{tpu_custom_call.1} parent=1 // pred_check
      _
    $region39: #{tpu_custom_call.1} parent=1 // pred_check_branch
      %369 = sbr.rel (0) target = $region41
    $region40: #{tpu_custom_call.1} parent=1 // pred_region
      %370 = dma.done [#allocation4], 128
    $region41: #{tpu_custom_call.1} parent=1 // pred_fallthru
      _
    %371 = vsyncpa [#allocation3], 1
    %372 = vsyncpa [#allocation6], 1
    %373 = vsyncpa [#allocation4], 1

</llo_original>
